<compile_context>
chip_gen: v7x
topology: tpu7x:2x2x1
jax: 0.10.0
libtpu: 0.0.40
codegen_flags: <defaults>
</compile_context>

<pallas_src>
import math
import numpy as np
import jax
import jax.numpy as jnp
from jax import lax
from jax.experimental import pallas as pl
from jax.experimental.pallas import tpu as pltpu

# ---- hyper-params implied by the module -------------------------------------
EMBED = 32            # embed_size
HID = EMBED // 2      # 16
CDIM = 128            # cross-modal common dim (MLP_image output / conv channels)
H = W = 64            # forced by positional_encoding_1d(8, 64*64) in forward()
HW = H * W
CIN = 9               # seg value (1 ch) + positional encoding (8 ch)
NTAPS = 9             # 3x3 seg-channel im2col taps (unpadded, lane-dense layout)
SMOOTH = 4.0          # lambda_softmax
R = 8                 # number of regions (reg_num)
BN_EPS = 1e-5
MAX_BATCH_BLOCK = 8   # batches fused per grid step (VMEM-safe on v7x)


# ---- glue: positional encoding / im2col (data movement only) ----------------
def positional_encoding_1d(d_model, length):
    position = jnp.arange(length, dtype=jnp.float32)[:, None]
    div_term = jnp.exp(jnp.arange(0, d_model, 2, dtype=jnp.float32)
                       * -(math.log(10000.0) / d_model))
    ang = position * div_term                                    # (L, d/2)
    pe = jnp.stack([jnp.sin(ang), jnp.cos(ang)], axis=-1)        # interleave
    return pe.reshape(length, d_model)                           # pe[:,0::2]=sin


def im2col_3x3(x):
    """(B, H, W, C) -> (B, H*W, 9*C), SAME zero padding, (kh, kw, cin) order."""
    B, Hh, Ww, C = x.shape
    xp = jnp.pad(x, ((0, 0), (1, 1), (1, 1), (0, 0)))
    cols = [xp[:, kh:kh + Hh, kw:kw + Ww, :] for kh in range(3) for kw in range(3)]
    return jnp.concatenate(cols, axis=-1).reshape(B, Hh * Ww, 9 * C)


def _seg_taps_transposed(seg):
    """(B, H, W) -> (B, 9, H*W): 3x3 SAME-padded taps, tap index = kh*3+kw."""
    # TODO(synk): on v5e these 9 taps could be built in-kernel from the raw
    # (B, HW) seg map (pltpu.roll +/-1, +/-W plus boundary masks) to cut the
    # per-batch HBM read from 144 KiB to 16 KiB.
    Bb = seg.shape[0]
    xp = jnp.pad(seg, ((0, 0), (1, 1), (1, 1)))
    taps = [xp[:, kh:kh + H, kw:kw + W] for kh in range(3) for kw in range(3)]
    return jnp.stack(taps, axis=1).reshape(Bb, NTAPS, HW)


# ---- fused kernel: conv(seg)+bias+relu, MLP_image, attention, refine ---------
def fused_kernel(lens_ref, segT_ref, rgns_ref, peT_ref, wsegT_ref,
                 wi1_ref, bi1_ref, wi2_ref, bi2_ref,
                 wf1_ref, bf1_ref, wf2_ref, bf2_ref,
                 o_ref, ctxT_ref):
    g = pl.program_id(0)
    nb = segT_ref.shape[0]                       # batches per grid step (static)

    # MLP_image, batched over the whole block: (nb*R, E) -> (nb*R, 128)
    x = rgns_ref[...].reshape(nb * R, EMBED)
    h = jnp.maximum(
        jnp.dot(x, wi1_ref[...], preferred_element_type=jnp.float32) + bi1_ref[...],
        0.0)
    q_all = jnp.dot(h, wi2_ref[...], preferred_element_type=jnp.float32) + bi2_ref[...]

    qscale = jnp.float32(SMOOTH / math.sqrt(CDIM))   # folded into q, not into (R,HW) s
    z_rows = []
    for i in range(nb):
        # embedding_Seg (transposed): ctxT = relu(Wseg^T @ taps + pe_bias^T).
        # ctxT never touches HBM; the 2 MiB scratch is reused across the block.
        y = jnp.dot(wsegT_ref[...], segT_ref[i],
                    preferred_element_type=jnp.float32)              # (128, HW)
        ctxT_ref[...] = jnp.maximum(y + peT_ref[...], 0.0)

        q_i = q_all[i * R:(i + 1) * R, :]                            # (R, 128)

        # scores: natural (R,128)@(128,HW) MXU matmul — no relayout of ctx.
        s = jnp.dot(q_i * qscale, ctxT_ref[...],
                    preferred_element_type=jnp.float32)              # (R, HW)
        p = jnp.exp(s - jnp.max(s, axis=-1, keepdims=True))
        denom = jnp.sum(p, axis=-1, keepdims=True)                   # (R, 1)

        # weighted context: wc^T = ctxT @ p^T; only the small p and the
        # (128, R) result are relayouted, never the 512-vreg ctx.
        wcT = lax.dot_general(ctxT_ref[...], p, (((1,), (1,)), ((), ())),
                              preferred_element_type=jnp.float32)    # (128, R)
        wc = wcT.T / denom                                           # (R, 128)

        # refine: mask = arange(R) < region_lens[batch], residual add
        length = lens_ref[g * nb + i]
        mask = (lax.broadcasted_iota(jnp.int32, (R, CDIM), 0) < length
                ).astype(jnp.float32)
        z_rows.append(wc * mask + q_i)

    # embed_fusion, batched over the whole block
    z = jnp.concatenate(z_rows, axis=0)                              # (nb*R, 128)
    hf = jnp.maximum(
        jnp.dot(z, wf1_ref[...], preferred_element_type=jnp.float32) + bf1_ref[...],
        0.0)
    out = jnp.dot(hf, wf2_ref[...], preferred_element_type=jnp.float32) + bf2_ref[...]
    o_ref[...] = out.reshape(nb, R, EMBED)


def fused_forward(region_lens, seg_tapsT, rgns, pe_biasT, w_segT, mlp_params, b_blk):
    b_pad = rgns.shape[0]
    const = lambda shape: pl.BlockSpec(shape, lambda b: (0,) * len(shape))
    return pl.pallas_call(
        fused_kernel,
        out_shape=jax.ShapeDtypeStruct((b_pad, R, EMBED), jnp.float32),
        grid=(b_pad // b_blk,),
        in_specs=[
            pl.BlockSpec(memory_space=pltpu.MemorySpace.SMEM),        # region_lens
            pl.BlockSpec((b_blk, NTAPS, HW), lambda b: (b, 0, 0)),    # seg taps^T
            pl.BlockSpec((b_blk, R, EMBED), lambda b: (b, 0, 0)),     # rgns
            const((CDIM, HW)),                                        # pe_bias^T (read once)
            const((CDIM, NTAPS)),                                     # BN-scaled Wseg^T
            const((EMBED, HID)), const((1, HID)),                     # MLP_image
            const((HID, CDIM)), const((1, CDIM)),
            const((CDIM, HID)), const((1, HID)),                      # embed_fusion
            const((HID, EMBED)), const((1, EMBED)),
        ],
        out_specs=pl.BlockSpec((b_blk, R, EMBED), lambda b: (b, 0, 0)),
        scratch_shapes=[pltpu.VMEM((CDIM, HW), jnp.float32)],         # ctx^T, reused
        compiler_params=pltpu.CompilerParams(
            dimension_semantics=("parallel",),
            vmem_limit_bytes=32 * 1024 * 1024),
    )(region_lens, seg_tapsT, rgns, pe_biasT, w_segT, *mlp_params)


def _choose_batch_block(batch):
    # Prefer an even grid extent (>= 2, keeps both v7x TensorCores busy) while
    # packing as many batches per step as possible (amortizes the ~0.35 us
    # per-step overhead, raises MXU row utilization of the R=8 matmuls).
    if batch <= 1:
        return 1
    return min(MAX_BATCH_BLOCK, (batch + 1) // 2)


# ---- end-to-end forward ------------------------------------------------------
def crossmodal_fusion_sp(params, rgns, seg_results_key, region_lens):
    # NOTE: H=W=64 (HW=4096) is forced by positional_encoding_1d(8, 64*64).
    B = rgns.shape[0]

    # Inference-mode BatchNorm folded into conv weight columns / a per-channel shift.
    # TODO(synk): training-mode BatchNorm (batch statistics) not reproduced.
    inv_std = 1.0 / jnp.sqrt(params['bn_var'] + BN_EPS)
    scale = params['bn_gamma'] * inv_std                                   # (128,)
    shift = params['bn_beta'] + (params['conv_b'] - params['bn_mean']) * scale
    conv_w = params['conv_w']                                              # (3,3,9,128)

    # Batch-invariant positional-encoding contribution (72 of 81 im2col taps),
    # conv bias and BN shift: hoisted once, transposed to the kernel's
    # (CDIM, HW) ctx orientation.
    pe = positional_encoding_1d(8, HW)                                     # (HW, 8)
    pe_cols = im2col_3x3(pe.reshape(1, H, W, 8))[0]                        # (HW, 72)
    w_pe = conv_w[:, :, 1:, :].reshape(72, CDIM) * scale[None, :]
    pe_biasT = (pe_cols @ w_pe + shift[None, :]).T                         # (128, HW)

    # Per-batch seg-channel taps, lane-dense and unpadded: (B, 9, HW).
    seg_tapsT = _seg_taps_transposed(seg_results_key.reshape(B, H, W))
    w_segT = (conv_w[:, :, 0, :].reshape(NTAPS, CDIM) * scale[None, :]).T  # (128, 9)

    lens = jnp.asarray(region_lens, jnp.int32)

    b_blk = _choose_batch_block(B)
    b_pad = ((B + b_blk - 1) // b_blk) * b_blk
    if b_pad != B:
        pad = b_pad - B
        seg_tapsT = jnp.pad(seg_tapsT, ((0, pad), (0, 0), (0, 0)))
        rgns = jnp.pad(rgns, ((0, pad), (0, 0), (0, 0)))
        lens = jnp.pad(lens, ((0, pad),))

    mlp_params = (params['wi1'], params['bi1'], params['wi2'], params['bi2'],
                  params['wf1'], params['bf1'], params['wf2'], params['bf2'])
    out = fused_forward(lens, seg_tapsT, rgns, pe_biasT, w_segT, mlp_params, b_blk)
    return out[:B]


# ---- deterministic synthetic parameters --------------------------------------
def init_params(key):
    ks = jax.random.split(key, 12)
    w = lambda k, shape, s=0.05: s * jax.random.normal(k, shape, dtype=jnp.float32)
    return dict(
        wi1=w(ks[0], (EMBED, HID)), bi1=w(ks[1], (1, HID)),
        wi2=w(ks[2], (HID, CDIM)), bi2=w(ks[3], (1, CDIM)),
        conv_w=w(ks[4], (3, 3, CIN, CDIM)), conv_b=w(ks[5], (CDIM,)),
        bn_gamma=1.0 + w(ks[6], (CDIM,)), bn_beta=w(ks[7], (CDIM,)),
        bn_mean=jnp.zeros((CDIM,), jnp.float32),
        bn_var=jnp.ones((CDIM,), jnp.float32),
        wf1=w(ks[8], (CDIM, HID)), bf1=w(ks[9], (1, HID)),
        wf2=w(ks[10], (HID, EMBED)), bf2=w(ks[11], (1, EMBED)),
    )


# ---- pure-JAX reference (for correctness check) ------------------------------
def reference(params, rgns, seg, region_lens):
    B = rgns.shape[0]
    pe = positional_encoding_1d(8, HW)
    x = jnp.concatenate([seg.reshape(B, HW, 1),
                         jnp.broadcast_to(pe[None], (B, HW, 8))], axis=-1)
    x = x.reshape(B, H, W, CIN)
    y = lax.conv_general_dilated(x, params['conv_w'], (1, 1), 'SAME',
                                 dimension_numbers=('NHWC', 'HWIO', 'NHWC'))
    y = y + params['conv_b']
    inv_std = 1.0 / jnp.sqrt(params['bn_var'] + BN_EPS)
    y = (y - params['bn_mean']) * (params['bn_gamma'] * inv_std) + params['bn_beta']
    ctx = jnp.maximum(y, 0.0).reshape(B, HW, CDIM)
    q = jnp.maximum(rgns @ params['wi1'] + params['bi1'], 0.0) @ params['wi2'] + params['bi2']
    s = jnp.einsum('brd,bkd->brk', q, ctx) / math.sqrt(CDIM)
    p = jax.nn.softmax(s * SMOOTH, axis=-1)
    wc = jnp.einsum('brk,bkd->brd', p, ctx)
    mask = (jnp.arange(R)[None, :] < region_lens[:, None]).astype(jnp.float32)
    z = wc * mask[..., None] + q
    return jnp.maximum(z @ params['wf1'] + params['bf1'], 0.0) @ params['wf2'] + params['bf2']


if __name__ == "__main__":
    key = jax.random.PRNGKey(0)
    kp, kr, ks_, _ = jax.random.split(key, 4)
    params = init_params(kp)

    B = 2
    rgns = jax.random.normal(kr, (B, R, EMBED), dtype=jnp.float32)          # regions
    seg_results_key = jax.random.normal(ks_, (B, H, W), dtype=jnp.float32)  # seg map
    region_lens = jnp.array([3, 6], dtype=jnp.int32)

    fwd = jax.jit(crossmodal_fusion_sp)
    out = jax.block_until_ready(fwd(params, rgns, seg_results_key, region_lens))
    assert out.shape == (B, R, EMBED)

    ref = reference(params, rgns, seg_results_key, region_lens)
    np.testing.assert_allclose(np.asarray(out), np.asarray(ref), rtol=2e-3, atol=2e-3)
    print("KERNEL_OK")
</pallas_src>

<mosaic_0001>
module attributes {stable_mosaic.version = 11 : i64} {
  func.func @fused_kernel(%arg0: i32, %arg1: memref<2xi32, #tpu.memory_space<smem>>, %arg2: memref<1x9x4096xf32, #tpu.memory_space<vmem>>, %arg3: memref<1x8x32xf32, #tpu.memory_space<vmem>>, %arg4: memref<128x4096xf32, #tpu.memory_space<vmem>>, %arg5: memref<128x9xf32, #tpu.memory_space<vmem>>, %arg6: memref<32x16xf32, #tpu.memory_space<vmem>>, %arg7: memref<1x16xf32, #tpu.memory_space<vmem>>, %arg8: memref<16x128xf32, #tpu.memory_space<vmem>>, %arg9: memref<1x128xf32, #tpu.memory_space<vmem>>, %arg10: memref<128x16xf32, #tpu.memory_space<vmem>>, %arg11: memref<1x16xf32, #tpu.memory_space<vmem>>, %arg12: memref<16x32xf32, #tpu.memory_space<vmem>>, %arg13: memref<1x32xf32, #tpu.memory_space<vmem>>, %arg14: memref<1x8x32xf32, #tpu.memory_space<vmem>>, %arg15: memref<128x4096xf32, #tpu.memory_space<vmem>>) attributes {dimension_semantics = [#tpu.dimension_semantics<parallel>], iteration_bounds = array<i64: 2>, scalar_prefetch = 0 : i64, scratch_operands = 1 : i64, tpu.core_type = #tpu.core_type<tc>, window_params = [{transform_indices = @transform_0, window_bounds = array<i64: 2>}, {transform_indices = @transform_1, window_bounds = array<i64: 1, 9, 4096>}, {transform_indices = @transform_2, window_bounds = array<i64: 1, 8, 32>}, {pipeline_mode = #tpu.pipeline_mode<synchronous>, transform_indices = @transform_3, window_bounds = array<i64: 128, 4096>}, {pipeline_mode = #tpu.pipeline_mode<synchronous>, transform_indices = @transform_4, window_bounds = array<i64: 128, 9>}, {pipeline_mode = #tpu.pipeline_mode<synchronous>, transform_indices = @transform_5, window_bounds = array<i64: 32, 16>}, {pipeline_mode = #tpu.pipeline_mode<synchronous>, transform_indices = @transform_6, window_bounds = array<i64: 1, 16>}, {pipeline_mode = #tpu.pipeline_mode<synchronous>, transform_indices = @transform_7, window_bounds = array<i64: 16, 128>}, {pipeline_mode = #tpu.pipeline_mode<synchronous>, transform_indices = @transform_8, window_bounds = array<i64: 1, 128>}, {pipeline_mode = #tpu.pipeline_mode<synchronous>, transform_indices = @transform_9, window_bounds = array<i64: 128, 16>}, {pipeline_mode = #tpu.pipeline_mode<synchronous>, transform_indices = @transform_10, window_bounds = array<i64: 1, 16>}, {pipeline_mode = #tpu.pipeline_mode<synchronous>, transform_indices = @transform_11, window_bounds = array<i64: 16, 32>}, {pipeline_mode = #tpu.pipeline_mode<synchronous>, transform_indices = @transform_12, window_bounds = array<i64: 1, 32>}, {transform_indices = @transform_13, window_bounds = array<i64: 1, 8, 32>}]} {
    %c0 = arith.constant 0 : index
    %c0_0 = arith.constant 0 : index
    %c0_1 = arith.constant 0 : index
    %0 = vector.load %arg3[%c0, %c0_0, %c0_1] : memref<1x8x32xf32, #tpu.memory_space<vmem>>, vector<1x8x32xf32>
    %1 = vector.shape_cast %0 : vector<1x8x32xf32> to vector<8x32xf32>
    %c0_2 = arith.constant 0 : index
    %c0_3 = arith.constant 0 : index
    %2 = vector.load %arg6[%c0_2, %c0_3] : memref<32x16xf32, #tpu.memory_space<vmem>>, vector<32x16xf32>
    %cst = arith.constant dense<0.000000e+00> : vector<8x16xf32>
    %3 = tpu.matmul %1, %2, %cst {dimension_numbers = #tpu.dot_dimension_numbers<[1], [0], [0], [1], [0, 0, 1, 1], [], []>} : vector<8x32xf32>, vector<32x16xf32>, vector<8x16xf32> -> vector<8x16xf32>
    %c0_4 = arith.constant 0 : index
    %c0_5 = arith.constant 0 : index
    %4 = vector.load %arg7[%c0_4, %c0_5] : memref<1x16xf32, #tpu.memory_space<vmem>>, vector<1x16xf32>
    %5 = vector.broadcast %4 : vector<1x16xf32> to vector<8x16xf32>
    %6 = arith.addf %3, %5 : vector<8x16xf32>
    %cst_6 = arith.constant 0.000000e+00 : f32
    %7 = vector.broadcast %cst_6 : f32 to vector<8x16xf32>
    %8 = arith.maximumf %6, %7 : vector<8x16xf32>
    %c0_7 = arith.constant 0 : index
    %c0_8 = arith.constant 0 : index
    %9 = vector.load %arg8[%c0_7, %c0_8] : memref<16x128xf32, #tpu.memory_space<vmem>>, vector<16x128xf32>
    %cst_9 = arith.constant dense<0.000000e+00> : vector<8x128xf32>
    %10 = tpu.matmul %8, %9, %cst_9 {dimension_numbers = #tpu.dot_dimension_numbers<[1], [0], [0], [1], [0, 0, 1, 1], [], []>} : vector<8x16xf32>, vector<16x128xf32>, vector<8x128xf32> -> vector<8x128xf32>
    %c0_10 = arith.constant 0 : index
    %c0_11 = arith.constant 0 : index
    %11 = vector.load %arg9[%c0_10, %c0_11] : memref<1x128xf32, #tpu.memory_space<vmem>>, vector<1x128xf32>
    %12 = vector.broadcast %11 : vector<1x128xf32> to vector<8x128xf32>
    %13 = arith.addf %10, %12 : vector<8x128xf32>
    %c0_12 = arith.constant 0 : index
    %c0_13 = arith.constant 0 : index
    %14 = vector.load %arg5[%c0_12, %c0_13] : memref<128x9xf32, #tpu.memory_space<vmem>>, vector<128x9xf32>
    %c0_14 = arith.constant 0 : index
    %c0_15 = arith.constant 0 : index
    %c0_16 = arith.constant 0 : index
    %15 = vector.load %arg2[%c0_14, %c0_15, %c0_16] : memref<1x9x4096xf32, #tpu.memory_space<vmem>>, vector<1x9x4096xf32>
    %16 = vector.shape_cast %15 : vector<1x9x4096xf32> to vector<9x4096xf32>
    %cst_17 = arith.constant dense<0.000000e+00> : vector<128x4096xf32>
    %17 = tpu.matmul %14, %16, %cst_17 {dimension_numbers = #tpu.dot_dimension_numbers<[1], [0], [0], [1], [0, 0, 1, 1], [], []>} : vector<128x9xf32>, vector<9x4096xf32>, vector<128x4096xf32> -> vector<128x4096xf32>
    %c0_18 = arith.constant 0 : index
    %c0_19 = arith.constant 0 : index
    %18 = vector.load %arg4[%c0_18, %c0_19] : memref<128x4096xf32, #tpu.memory_space<vmem>>, vector<128x4096xf32>
    %19 = arith.addf %17, %18 : vector<128x4096xf32>
    %cst_20 = arith.constant 0.000000e+00 : f32
    %20 = vector.broadcast %cst_20 : f32 to vector<128x4096xf32>
    %21 = arith.maximumf %19, %20 : vector<128x4096xf32>
    %c0_21 = arith.constant 0 : index
    %c0_22 = arith.constant 0 : index
    %22 = vector.load %arg15[%c0_21, %c0_22] : memref<128x4096xf32, #tpu.memory_space<vmem>>, vector<128x4096xf32>
    tpu.vector_store %arg15[%c0_21, %c0_22], %21 {strides = array<i32>} : memref<128x4096xf32, #tpu.memory_space<vmem>>, vector<128x4096xf32>,
    %cst_23 = arith.constant 0.353553385 : f32
    %23 = vector.broadcast %cst_23 : f32 to vector<8x128xf32>
    %24 = arith.mulf %13, %23 : vector<8x128xf32>
    %c0_24 = arith.constant 0 : index
    %c0_25 = arith.constant 0 : index
    %25 = vector.load %arg15[%c0_24, %c0_25] : memref<128x4096xf32, #tpu.memory_space<vmem>>, vector<128x4096xf32>
    %cst_26 = arith.constant dense<0.000000e+00> : vector<8x4096xf32>
    %26 = tpu.matmul %24, %25, %cst_26 {dimension_numbers = #tpu.dot_dimension_numbers<[1], [0], [0], [1], [0, 0, 1, 1], [], []>} : vector<8x128xf32>, vector<128x4096xf32>, vector<8x4096xf32> -> vector<8x4096xf32>
    %cst_27 = arith.constant dense<0xFF800000> : vector<8xf32>
    %27 = vector.multi_reduction <maximumf>, %26, %cst_27 [1] : vector<8x4096xf32> to vector<8xf32>
    %28 = vector.shape_cast %27 : vector<8xf32> to vector<8x1xf32>
    %29 = vector.broadcast %28 : vector<8x1xf32> to vector<8x4096xf32>
    %30 = arith.subf %26, %29 : vector<8x4096xf32>
    %31 = math.exp %30 : vector<8x4096xf32>
    %cst_28 = arith.constant dense<0.000000e+00> : vector<8xf32>
    %32 = vector.multi_reduction <add>, %31, %cst_28 [1] : vector<8x4096xf32> to vector<8xf32>
    %33 = vector.shape_cast %32 : vector<8xf32> to vector<8x1xf32>
    %c0_29 = arith.constant 0 : index
    %c0_30 = arith.constant 0 : index
    %34 = vector.load %arg15[%c0_29, %c0_30] : memref<128x4096xf32, #tpu.memory_space<vmem>>, vector<128x4096xf32>
    %cst_31 = arith.constant dense<0.000000e+00> : vector<128x8xf32>
    %35 = tpu.matmul %34, %31, %cst_31 {dimension_numbers = #tpu.dot_dimension_numbers<[1], [1], [0], [0], [0, 0, 1, 0], [], []>} : vector<128x4096xf32>, vector<8x4096xf32>, vector<128x8xf32> -> vector<128x8xf32>
    %36 = tpu.transpose %35, [1, 0] : vector<128x8xf32> -> vector<8x128xf32>
    %37 = vector.broadcast %33 : vector<8x1xf32> to vector<8x128xf32>
    %38 = arith.divf %36, %37 : vector<8x128xf32>
    %c1_i32 = arith.constant 1 : i32
    %39 = arith.muli %arg0, %c1_i32 : i32
    %c0_i32 = arith.constant 0 : i32
    %40 = arith.addi %39, %c0_i32 : i32
    %41 = arith.index_cast %40 : i32 to index
    %42 = memref.load %arg1[%41] : memref<2xi32, #tpu.memory_space<smem>>
    %43 = tpu.iota {dimensions = array<i32: 0>} : vector<8x128xi32>
    %44 = vector.broadcast %42 : i32 to vector<8x128xi32>
    %45 = arith.cmpi slt, %43, %44 : vector<8x128xi32>
    %46 = arith.extui %45 : vector<8x128xi1> to vector<8x128xi32>
    %47 = arith.sitofp %46 : vector<8x128xi32> to vector<8x128xf32>
    %48 = arith.mulf %38, %47 : vector<8x128xf32>
    %49 = arith.addf %48, %13 : vector<8x128xf32>
    %c0_32 = arith.constant 0 : index
    %c0_33 = arith.constant 0 : index
    %50 = vector.load %arg10[%c0_32, %c0_33] : memref<128x16xf32, #tpu.memory_space<vmem>>, vector<128x16xf32>
    %cst_34 = arith.constant dense<0.000000e+00> : vector<8x16xf32>
    %51 = tpu.matmul %49, %50, %cst_34 {dimension_numbers = #tpu.dot_dimension_numbers<[1], [0], [0], [1], [0, 0, 1, 1], [], []>} : vector<8x128xf32>, vector<128x16xf32>, vector<8x16xf32> -> vector<8x16xf32>
    %c0_35 = arith.constant 0 : index
    %c0_36 = arith.constant 0 : index
    %52 = vector.load %arg11[%c0_35, %c0_36] : memref<1x16xf32, #tpu.memory_space<vmem>>, vector<1x16xf32>
    %53 = vector.broadcast %52 : vector<1x16xf32> to vector<8x16xf32>
    %54 = arith.addf %51, %53 : vector<8x16xf32>
    %cst_37 = arith.constant 0.000000e+00 : f32
    %55 = vector.broadcast %cst_37 : f32 to vector<8x16xf32>
    %56 = arith.maximumf %54, %55 : vector<8x16xf32>
    %c0_38 = arith.constant 0 : index
    %c0_39 = arith.constant 0 : index
    %57 = vector.load %arg12[%c0_38, %c0_39] : memref<16x32xf32, #tpu.memory_space<vmem>>, vector<16x32xf32>
    %cst_40 = arith.constant dense<0.000000e+00> : vector<8x32xf32>
    %58 = tpu.matmul %56, %57, %cst_40 {dimension_numbers = #tpu.dot_dimension_numbers<[1], [0], [0], [1], [0, 0, 1, 1], [], []>} : vector<8x16xf32>, vector<16x32xf32>, vector<8x32xf32> -> vector<8x32xf32>
    %c0_41 = arith.constant 0 : index
    %c0_42 = arith.constant 0 : index
    %59 = vector.load %arg13[%c0_41, %c0_42] : memref<1x32xf32, #tpu.memory_space<vmem>>, vector<1x32xf32>
    %60 = vector.broadcast %59 : vector<1x32xf32> to vector<8x32xf32>
    %61 = arith.addf %58, %60 : vector<8x32xf32>
    %62 = vector.shape_cast %61 : vector<8x32xf32> to vector<1x8x32xf32>
    %c0_43 = arith.constant 0 : index
    %c0_44 = arith.constant 0 : index
    %c0_45 = arith.constant 0 : index
    %63 = vector.load %arg14[%c0_43, %c0_44, %c0_45] : memref<1x8x32xf32, #tpu.memory_space<vmem>>, vector<1x8x32xf32>
    tpu.vector_store %arg14[%c0_43, %c0_44, %c0_45], %62 {strides = array<i32>} : memref<1x8x32xf32, #tpu.memory_space<vmem>>, vector<1x8x32xf32>,
    return
  }
  func.func @transform_0(%arg0: i32) -> i32 {
    %c0_i32 = arith.constant 0 : i32
    %c0_i32_0 = arith.constant 0 : i32
    return %c0_i32 : i32
  }
  func.func @transform_1(%arg0: i32) -> (i32, i32, i32) {
    %c0_i32 = arith.constant 0 : i32
    %c0_i32_0 = arith.constant 0 : i32
    %c0_i32_1 = arith.constant 0 : i32
    return %arg0, %c0_i32, %c0_i32_0 : i32, i32, i32
  }
  func.func @transform_2(%arg0: i32) -> (i32, i32, i32) {
    %c0_i32 = arith.constant 0 : i32
    %c0_i32_0 = arith.constant 0 : i32
    %c0_i32_1 = arith.constant 0 : i32
    return %arg0, %c0_i32, %c0_i32_0 : i32, i32, i32
  }
  func.func @transform_3(%arg0: i32) -> (i32, i32) {
    %c0_i32 = arith.constant 0 : i32
    %c0_i32_0 = arith.constant 0 : i32
    %c0_i32_1 = arith.constant 0 : i32
    return %c0_i32, %c0_i32_0 : i32, i32
  }
  func.func @transform_4(%arg0: i32) -> (i32, i32) {
    %c0_i32 = arith.constant 0 : i32
    %c0_i32_0 = arith.constant 0 : i32
    %c0_i32_1 = arith.constant 0 : i32
    return %c0_i32, %c0_i32_0 : i32, i32
  }
  func.func @transform_5(%arg0: i32) -> (i32, i32) {
    %c0_i32 = arith.constant 0 : i32
    %c0_i32_0 = arith.constant 0 : i32
    %c0_i32_1 = arith.constant 0 : i32
    return %c0_i32, %c0_i32_0 : i32, i32
  }
  func.func @transform_6(%arg0: i32) -> (i32, i32) {
    %c0_i32 = arith.constant 0 : i32
    %c0_i32_0 = arith.constant 0 : i32
    %c0_i32_1 = arith.constant 0 : i32
    return %c0_i32, %c0_i32_0 : i32, i32
  }
  func.func @transform_7(%arg0: i32) -> (i32, i32) {
    %c0_i32 = arith.constant 0 : i32
    %c0_i32_0 = arith.constant 0 : i32
    %c0_i32_1 = arith.constant 0 : i32
    return %c0_i32, %c0_i32_0 : i32, i32
  }
  func.func @transform_8(%arg0: i32) -> (i32, i32) {
    %c0_i32 = arith.constant 0 : i32
    %c0_i32_0 = arith.constant 0 : i32
    %c0_i32_1 = arith.constant 0 : i32
    return %c0_i32, %c0_i32_0 : i32, i32
  }
  func.func @transform_9(%arg0: i32) -> (i32, i32) {
    %c0_i32 = arith.constant 0 : i32
    %c0_i32_0 = arith.constant 0 : i32
    %c0_i32_1 = arith.constant 0 : i32
    return %c0_i32, %c0_i32_0 : i32, i32
  }
  func.func @transform_10(%arg0: i32) -> (i32, i32) {
    %c0_i32 = arith.constant 0 : i32
    %c0_i32_0 = arith.constant 0 : i32
    %c0_i32_1 = arith.constant 0 : i32
    return %c0_i32, %c0_i32_0 : i32, i32
  }
  func.func @transform_11(%arg0: i32) -> (i32, i32) {
    %c0_i32 = arith.constant 0 : i32
    %c0_i32_0 = arith.constant 0 : i32
    %c0_i32_1 = arith.constant 0 : i32
    return %c0_i32, %c0_i32_0 : i32, i32
  }
  func.func @transform_12(%arg0: i32) -> (i32, i32) {
    %c0_i32 = arith.constant 0 : i32
    %c0_i32_0 = arith.constant 0 : i32
    %c0_i32_1 = arith.constant 0 : i32
    return %c0_i32, %c0_i32_0 : i32, i32
  }
  func.func @transform_13(%arg0: i32) -> (i32, i32, i32) {
    %c0_i32 = arith.constant 0 : i32
    %c0_i32_0 = arith.constant 0 : i32
    %c0_i32_1 = arith.constant 0 : i32
    return %arg0, %c0_i32, %c0_i32_0 : i32, i32, i32
  }
}

</mosaic_0001>

<llo_original>
// kernel: squeeze.1
$region0: #{squeeze.1}
  %s0 = inlined_call_operand.vmem [shape: f32[3,3,1,128], index: 0, kind: input, shape index: {}]
  %s1 = inlined_call_operand.vmem [shape: f32[9,128], index: 1, kind: output, shape index: {}]
  $region1: #{squeeze.1} parent=0
    #allocation0 [shape = 'u8[12288]{0}', space=vmem, size = 0x3000, scoped, tag = 'scoped mem for input reshape']
    %s3 = sshllo.u32 0, 4
    %s4 = smul.addr 4, 2
    %s5 = scalar_lea.vmem %s0, %s4
    %v6 = vld [vmem:[%s5] sm:%s3]
    %s7 = scalar_lea.vmem [#allocation0], 16
    %8 = vst [vmem:[%s7] sm:%s3] %v6
    %s9 = scalar_lea.vmem %s0, 4
    %v10 = vld [vmem:[%s9] sm:%s3]
    %s11 = scalar_lea.vmem [#allocation0], 8
    %12 = vst [vmem:[%s11] sm:%s3] %v10
    %v13 = vld [vmem:[%s0] sm:%s3]
    %14 = vst [vmem:[#allocation0] sm:%s3] %v13
    %v15 = vld [vmem:[#allocation0] sm:$0x7]
    %16 = vst [vmem:[%s1] sm:$0x7] %v15
    %s17 = scalar_lea.vmem [#allocation0], 8
    %v18 = vld [vmem:[%s17] sm:$0x7]
    %s19 = scalar_lea.vmem %s1, 3
    %20 = vst [vmem:[%s19] sm:$0x7] %v18
    %s21 = scalar_lea.vmem [#allocation0], 16
    %v22 = vld [vmem:[%s21] sm:$0x7]
    %s23 = scalar_lea.vmem %s1, 6
    %24 = vst [vmem:[%s23] sm:$0x7] %v22

</llo_original>
